<compile_context>
chip_gen: v5e
topology: v5e:2x2
jax: 0.10.0
libtpu: 0.0.40
codegen_flags: <defaults>
</compile_context>

<pallas_src>
import jax
import jax.numpy as jnp
from jax import lax
from jax.experimental import pallas as pl
from jax.experimental.pallas import tpu as pltpu


LANE = 128  # TPU vreg lane width; gate pitch & padded hidden width are multiples of this.


def _round_up(x, m):
    return (x + m - 1) // m * m


def gru_embed_kernel(ids_ref, gtab_ref, whh_ref, bhn_ref, o_ref, gi_sc):
    """Fused embedding lookup + GRU over time for one batch tile; writes final hidden.

    ids_ref : (TB, T)        int32 token ids for this batch tile
    gtab_ref: (VP, 3*GP)     per-token gate table = emb @ W_ih^T (+ folded r/z/n biases)
    whh_ref : (GP, 3*GP)     hidden->gates weights, gate-padded ([r|z|n] @ 128-lane pitch)
    bhn_ref : (1, GP)        hidden n-gate bias b_hn (must stay inside the r*(.) term)
    o_ref   : (TB, GP)       final hidden state h_T, lane-padded to GP (>=128), f32
    gi_sc   : (T, TB, 3*GP)  f32 scratch holding the hoisted input-gate terms, time-major
    """
    TB, T = ids_ref.shape
    VP = gtab_ref.shape[0]
    GP = whh_ref.shape[0]          # gate pitch == padded hidden width (multiple of 128)
    cdt = gtab_ref.dtype           # MXU operand dtype (bf16 on the fast path, else f32)

    ids = ids_ref[...]             # (TB, T) int32
    gtab = gtab_ref[...]           # (VP, 3*GP)  VMEM-resident (constant index_map)
    whh = whh_ref[...]             # (GP, 3*GP)

    # Hoisted out of all loops (JAX does not CSE broadcast/iota).
    vocab_iota = lax.broadcasted_iota(jnp.int32, (TB, VP), 1)
    bhn = jnp.broadcast_to(bhn_ref[...], (TB, GP))               # (TB, GP)

    # ---- Phase 1: embedding lookup + input projection for ALL timesteps in ONE matmul.
    # Time-major one-hot slab: rows [t*TB, (t+1)*TB) select timestep t's tokens, so the
    # single (T*TB, VP) @ (VP, 3*GP) dot fills the MXU (M = T*TB, not TB) and Phase 2
    # reads each step's gates as a contiguous (TB, 3*GP) block.  The selector is exact
    # in bf16 (0/1 values); accumulation stays f32.
    onehot_tm = jnp.concatenate(
        [(ids[:, t:t + 1] == vocab_iota).astype(jnp.float32) for t in range(T)],
        axis=0).astype(cdt)                                       # (T*TB, VP)
    gi_all = jnp.dot(onehot_tm, gtab,
                     preferred_element_type=jnp.float32)          # (T*TB, 3*GP) f32
    gi_sc[...] = gi_all.reshape(T, TB, 3 * GP)

    # ---- Phase 2: recurrence — only h @ W_hh remains on the serial chain.
    # fori_loop (not a Python unroll) bounds live ranges so one step's (TB, 3*GP)
    # temporaries never coexist with the next step's.
    def step(t, h):
        gi = gi_sc[t]                                             # (TB, 3*GP) contiguous
        gh = jnp.dot(h.astype(cdt), whh,
                     preferred_element_type=jnp.float32)          # (TB, 3*GP)
        # Gate slices sit at 128-lane offsets -> free vreg-aligned views.
        r = jax.nn.sigmoid(gi[:, :GP] + gh[:, :GP])
        z = jax.nn.sigmoid(gi[:, GP:2 * GP] + gh[:, GP:2 * GP])
        n = jnp.tanh(gi[:, 2 * GP:] + r * (gh[:, 2 * GP:] + bhn))
        # Padded lanes stay exactly 0: all padded weight/bias entries are 0, so
        # r=z=0.5, n=0 there and h_pad' = 0.5*h_pad with h_pad(0)=0.
        return (1.0 - z) * n + z * h

    h = lax.fori_loop(0, T, step, jnp.zeros((TB, GP), jnp.float32))
    o_ref[...] = h                 # (TB, GP) lane-dense, unmasked store


def prepare_gru_params(emb_table, w_ih_t, w_hh_t, b_ih, b_hh, *, use_bf16_mxu=True):
    """Builds the gate-padded, embedding-folded, bias-folded tables for the kernel."""
    f32 = jnp.float32
    V = emb_table.shape[0]
    H = w_hh_t.shape[0]
    GP = _round_up(H, LANE)        # gate pitch / padded hidden width
    VP = _round_up(V, LANE)        # padded vocab (tidy K for the one-hot matmul)
    hp = lax.Precision.HIGHEST
    cdt = jnp.bfloat16 if use_bf16_mxu else f32

    # Fold the embedding table with W_ih: the in-kernel one-hot row-select of this table
    # is exactly "embedding lookup followed by the input projection".
    core = jnp.dot(emb_table.astype(f32), w_ih_t.astype(f32), precision=hp)   # (V, 3H)

    gtab = jnp.zeros((VP, 3 * GP), f32)
    whh = jnp.zeros((GP, 3 * GP), f32)
    bhn = jnp.zeros((1, GP), f32)
    for g in range(3):             # gates in PyTorch order [r, z, n]
        # r/z biases sit outside the r*(.) term -> fold (b_ih+b_hh) straight into the
        # table rows; n keeps b_in on the input side and b_hn on the recurrent side.
        bias = b_ih[g * H:(g + 1) * H].astype(f32)
        if g < 2:
            bias = bias + b_hh[g * H:(g + 1) * H].astype(f32)
        gtab = gtab.at[:V, g * GP:g * GP + H].set(core[:, g * H:(g + 1) * H] + bias[None, :])
        whh = whh.at[:H, g * GP:g * GP + H].set(w_hh_t[:, g * H:(g + 1) * H].astype(f32))
    bhn = bhn.at[0, :H].set(b_hh[2 * H:].astype(f32))

    # Only the MXU operand tables are cast; bhn and all elementwise gate math stay f32.
    return gtab.astype(cdt), whh.astype(cdt), bhn


def _choose_tiling(batch, max_tile_b=256):
    """Pick (B_pad, tile_b).

    Never lets awkward batch sizes degrade to a tiny tile (pad B up to the tile
    instead), and splits into >= 2 "parallel" tiles whenever B_pad > 8 so the second
    TensorCore on v7x gets work (one extra ~0.35 us grid step on 1-TC v5e/v6e).
    """
    b8 = _round_up(batch, 8)
    if b8 <= 8:
        return b8, b8                                    # grid=(1,): nothing to split
    if b8 <= 2 * max_tile_b:
        tile_b = _round_up((b8 + 1) // 2, 8)             # exactly 2 tiles
    else:
        tile_b = max_tile_b
    return _round_up(b8, tile_b), tile_b


def gru_embed_final_hidden(ids, gtab, whh, bhn, *, hidden_size, max_tile_b=256):
    """ids: (B, T) int32 -> (B, hidden_size) f32 final GRU hidden state."""
    B, T = ids.shape
    GP = whh.shape[0]
    GP3 = whh.shape[1]

    B_pad, tile_b = _choose_tiling(B, max_tile_b)
    if B_pad != B:
        ids = jnp.pad(ids, ((0, B_pad - B), (0, 0)))     # padded rows sliced off below

    # VMEM per tile (worst case tile_b=256, T=8): gi_sc scratch ~3 MiB + one-hot ~1 MiB
    # + weights ~0.2 MiB + io tiles -> well under the 32 MiB scoped default everywhere.
    out = pl.pallas_call(
        gru_embed_kernel,
        out_shape=jax.ShapeDtypeStruct((B_pad, GP), jnp.float32),
        grid_spec=pltpu.PrefetchScalarGridSpec(
            num_scalar_prefetch=0,
            grid=(B_pad // tile_b,),
            in_specs=[
                pl.BlockSpec((tile_b, T), lambda i: (i, 0)),    # ids: only per-step DMA
                pl.BlockSpec(gtab.shape, lambda i: (0, 0)),     # weights: VMEM-resident
                pl.BlockSpec(whh.shape, lambda i: (0, 0)),
                pl.BlockSpec(bhn.shape, lambda i: (0, 0)),
            ],
            out_specs=pl.BlockSpec((tile_b, GP), lambda i: (i, 0)),
            scratch_shapes=[pltpu.VMEM((T, tile_b, GP3), jnp.float32)],
        ),
        compiler_params=pltpu.CompilerParams(
            dimension_semantics=("parallel",)),   # batch tiles shard across TCs on v7x
    )(ids, gtab, whh, bhn)

    return out[:B, :hidden_size]


def embedding_network_forward(sen_pyids, max_sen_len, params, *, seq_len, pydim,
                              hidden_size, use_bf16_mxu=True):
    """Mirrors EmbeddingNetwork.forward (GRU dropout is inactive for num_layers=1)."""
    del pydim  # implied by emb_table.shape[1]
    emb_table, w_ih_t, w_hh_t, b_ih, b_hh = params

    ids = sen_pyids.reshape(-1, seq_len).astype(jnp.int32)      # (B, T)
    B = ids.shape[0]
    assert B % max_sen_len == 0, (
        f"total rows {B} must be divisible by max_sen_len {max_sen_len} for the final reshape")

    gtab, whh, bhn = prepare_gru_params(emb_table, w_ih_t, w_hh_t, b_ih, b_hh,
                                        use_bf16_mxu=use_bf16_mxu)

    final_h = gru_embed_final_hidden(ids, gtab, whh, bhn,
                                     hidden_size=hidden_size)    # (B, H)

    # final_out has shape (num_layers*dirs=1, B, H); mean over dim 0 keepdim is identity.
    final_out = final_h[None, :, :]
    final_out = jnp.mean(final_out, axis=0, keepdims=True)
    return final_out.reshape(-1, max_sen_len, hidden_size)


def embedding_network_reference(sen_pyids, max_sen_len, params, *, seq_len, pydim,
                                hidden_size):
    """Pure-JAX reference (PyTorch GRU math, [r,z,n] gate order, f32 HIGHEST)."""
    del pydim
    emb_table, w_ih_t, w_hh_t, b_ih, b_hh = params
    H = hidden_size
    hp = lax.Precision.HIGHEST

    ids = sen_pyids.reshape(-1, seq_len)
    x = jnp.take(emb_table, ids, axis=0).astype(jnp.float32)     # (B, T, PYDIM)

    def step(h, x_t):
        gi = jnp.dot(x_t, w_ih_t, precision=hp) + b_ih
        gh = jnp.dot(h, w_hh_t, precision=hp) + b_hh
        r = jax.nn.sigmoid(gi[:, :H] + gh[:, :H])
        z = jax.nn.sigmoid(gi[:, H:2 * H] + gh[:, H:2 * H])
        n = jnp.tanh(gi[:, 2 * H:] + r * gh[:, 2 * H:])
        return (1.0 - z) * n + z * h, None

    h0 = jnp.zeros((ids.shape[0], H), jnp.float32)
    h_T, _ = lax.scan(step, h0, jnp.swapaxes(x, 0, 1))
    final_out = jnp.mean(h_T[None, :, :], axis=0, keepdims=True)
    return final_out.reshape(-1, max_sen_len, H)


def init_params(key, num_embeddings, pydim, hidden_size):
    """Deterministic synthetic parameters matching the PyTorch module's shapes."""
    k_emb, k_wih, k_whh, k_bih, k_bhh = jax.random.split(key, 5)
    bound = 1.0 / jnp.sqrt(hidden_size)
    emb_table = jax.random.normal(k_emb, (num_embeddings, pydim), jnp.float32)
    # PyTorch stores weight_ih_l0: (3H, PYDIM), weight_hh_l0: (3H, H); keep them transposed.
    w_ih_t = jax.random.uniform(k_wih, (pydim, 3 * hidden_size), jnp.float32, -bound, bound)
    w_hh_t = jax.random.uniform(k_whh, (hidden_size, 3 * hidden_size), jnp.float32, -bound, bound)
    b_ih = jax.random.uniform(k_bih, (3 * hidden_size,), jnp.float32, -bound, bound)
    b_hh = jax.random.uniform(k_bhh, (3 * hidden_size,), jnp.float32, -bound, bound)
    return emb_table, w_ih_t, w_hh_t, b_ih, b_hh


if __name__ == "__main__":
    # Small, module-consistent shapes.
    BATCH = 2
    MAX_SEN_LEN = 8       # max_sen_len passed to forward
    PYLEN = 8             # self.seq_len
    PYDIM = 32            # self.PYDIM
    HIDDEN = 32           # config.hidden_size
    NUM_EMB = 100         # num_embeddings

    key = jax.random.PRNGKey(0)
    k_params, k_ids = jax.random.split(key)
    params = init_params(k_params, NUM_EMB, PYDIM, HIDDEN)

    sen_pyids = jax.random.randint(k_ids, (BATCH, MAX_SEN_LEN, PYLEN), 0, NUM_EMB, jnp.int32)

    # Performance path: bf16 MXU operands, f32 gate math.
    out = embedding_network_forward(
        sen_pyids, MAX_SEN_LEN, params,
        seq_len=PYLEN, pydim=PYDIM, hidden_size=HIDDEN, use_bf16_mxu=True)
    out = jax.block_until_ready(out)
    assert out.shape == (BATCH, MAX_SEN_LEN, HIDDEN), out.shape

    ref = embedding_network_reference(
        sen_pyids, MAX_SEN_LEN, params,
        seq_len=PYLEN, pydim=PYDIM, hidden_size=HIDDEN)

    # Exactness check: the same kernel with f32 MXU operands must match the f32
    # reference tightly (validates layout, fused lookup, bias folding, tiling, loop).
    out_f32 = embedding_network_forward(
        sen_pyids, MAX_SEN_LEN, params,
        seq_len=PYLEN, pydim=PYDIM, hidden_size=HIDDEN, use_bf16_mxu=False)
    out_f32 = jax.block_until_ready(out_f32)
    err_exact = float(jnp.max(jnp.abs(out_f32 - ref)))
    assert err_exact < 1e-3, f"f32-path max abs err vs reference = {err_exact}"

    # bf16-MXU path: the only gap vs the f32 reference is bf16 weight quantization
    # (~2^-9 relative) accumulated over T=8 recurrence steps.
    err_fast = float(jnp.max(jnp.abs(out - ref)))
    assert err_fast < 3e-2, f"bf16-path max abs err vs reference = {err_fast}"

    print("KERNEL_OK")
</pallas_src>

<mosaic_0001>
module attributes {stable_mosaic.version = 11 : i64} {
  func.func @gru_embed_kernel(%arg0: i32, %arg1: memref<8x8xi32, #tpu.memory_space<vmem>>, %arg2: memref<128x384xbf16, #tpu.memory_space<vmem>>, %arg3: memref<128x384xbf16, #tpu.memory_space<vmem>>, %arg4: memref<1x128xf32, #tpu.memory_space<vmem>>, %arg5: memref<8x128xf32, #tpu.memory_space<vmem>>, %arg6: memref<8x8x384xf32, #tpu.memory_space<vmem>>) attributes {dimension_semantics = [#tpu.dimension_semantics<parallel>], iteration_bounds = array<i64: 2>, scalar_prefetch = 0 : i64, scratch_operands = 1 : i64, tpu.core_type = #tpu.core_type<tc>, window_params = [{transform_indices = @transform_0, window_bounds = array<i64: 8, 8>}, {pipeline_mode = #tpu.pipeline_mode<synchronous>, transform_indices = @transform_1, window_bounds = array<i64: 128, 384>}, {pipeline_mode = #tpu.pipeline_mode<synchronous>, transform_indices = @transform_2, window_bounds = array<i64: 128, 384>}, {pipeline_mode = #tpu.pipeline_mode<synchronous>, transform_indices = @transform_3, window_bounds = array<i64: 1, 128>}, {transform_indices = @transform_4, window_bounds = array<i64: 8, 128>}]} {
    %c0 = arith.constant 0 : index
    %c0_0 = arith.constant 0 : index
    %0 = vector.load %arg1[%c0, %c0_0] : memref<8x8xi32, #tpu.memory_space<vmem>>, vector<8x8xi32>
    %c0_1 = arith.constant 0 : index
    %c0_2 = arith.constant 0 : index
    %1 = vector.load %arg2[%c0_1, %c0_2] : memref<128x384xbf16, #tpu.memory_space<vmem>>, vector<128x384xbf16>
    %c0_3 = arith.constant 0 : index
    %c0_4 = arith.constant 0 : index
    %2 = vector.load %arg3[%c0_3, %c0_4] : memref<128x384xbf16, #tpu.memory_space<vmem>>, vector<128x384xbf16>
    %3 = tpu.iota {dimensions = array<i32: 1>} : vector<8x128xi32>
    %c0_5 = arith.constant 0 : index
    %c0_6 = arith.constant 0 : index
    %4 = vector.load %arg4[%c0_5, %c0_6] : memref<1x128xf32, #tpu.memory_space<vmem>>, vector<1x128xf32>
    %5 = vector.shape_cast %4 : vector<1x128xf32> to vector<1x128xf32>
    %6 = vector.broadcast %5 : vector<1x128xf32> to vector<8x128xf32>
    %7 = vector.extract_strided_slice %0 {offsets = [0, 0], sizes = [8, 1], strides = [1, 1]} : vector<8x8xi32> to vector<8x1xi32>
    %8 = vector.broadcast %7 : vector<8x1xi32> to vector<8x128xi32>
    %9 = arith.cmpi eq, %8, %3 : vector<8x128xi32>
    %10 = arith.extui %9 : vector<8x128xi1> to vector<8x128xi32>
    %11 = arith.sitofp %10 : vector<8x128xi32> to vector<8x128xf32>
    %12 = vector.extract_strided_slice %0 {offsets = [0, 1], sizes = [8, 1], strides = [1, 1]} : vector<8x8xi32> to vector<8x1xi32>
    %13 = vector.broadcast %12 : vector<8x1xi32> to vector<8x128xi32>
    %14 = arith.cmpi eq, %13, %3 : vector<8x128xi32>
    %15 = arith.extui %14 : vector<8x128xi1> to vector<8x128xi32>
    %16 = arith.sitofp %15 : vector<8x128xi32> to vector<8x128xf32>
    %17 = vector.extract_strided_slice %0 {offsets = [0, 2], sizes = [8, 1], strides = [1, 1]} : vector<8x8xi32> to vector<8x1xi32>
    %18 = vector.broadcast %17 : vector<8x1xi32> to vector<8x128xi32>
    %19 = arith.cmpi eq, %18, %3 : vector<8x128xi32>
    %20 = arith.extui %19 : vector<8x128xi1> to vector<8x128xi32>
    %21 = arith.sitofp %20 : vector<8x128xi32> to vector<8x128xf32>
    %22 = vector.extract_strided_slice %0 {offsets = [0, 3], sizes = [8, 1], strides = [1, 1]} : vector<8x8xi32> to vector<8x1xi32>
    %23 = vector.broadcast %22 : vector<8x1xi32> to vector<8x128xi32>
    %24 = arith.cmpi eq, %23, %3 : vector<8x128xi32>
    %25 = arith.extui %24 : vector<8x128xi1> to vector<8x128xi32>
    %26 = arith.sitofp %25 : vector<8x128xi32> to vector<8x128xf32>
    %27 = vector.extract_strided_slice %0 {offsets = [0, 4], sizes = [8, 1], strides = [1, 1]} : vector<8x8xi32> to vector<8x1xi32>
    %28 = vector.broadcast %27 : vector<8x1xi32> to vector<8x128xi32>
    %29 = arith.cmpi eq, %28, %3 : vector<8x128xi32>
    %30 = arith.extui %29 : vector<8x128xi1> to vector<8x128xi32>
    %31 = arith.sitofp %30 : vector<8x128xi32> to vector<8x128xf32>
    %32 = vector.extract_strided_slice %0 {offsets = [0, 5], sizes = [8, 1], strides = [1, 1]} : vector<8x8xi32> to vector<8x1xi32>
    %33 = vector.broadcast %32 : vector<8x1xi32> to vector<8x128xi32>
    %34 = arith.cmpi eq, %33, %3 : vector<8x128xi32>
    %35 = arith.extui %34 : vector<8x128xi1> to vector<8x128xi32>
    %36 = arith.sitofp %35 : vector<8x128xi32> to vector<8x128xf32>
    %37 = vector.extract_strided_slice %0 {offsets = [0, 6], sizes = [8, 1], strides = [1, 1]} : vector<8x8xi32> to vector<8x1xi32>
    %38 = vector.broadcast %37 : vector<8x1xi32> to vector<8x128xi32>
    %39 = arith.cmpi eq, %38, %3 : vector<8x128xi32>
    %40 = arith.extui %39 : vector<8x128xi1> to vector<8x128xi32>
    %41 = arith.sitofp %40 : vector<8x128xi32> to vector<8x128xf32>
    %42 = vector.extract_strided_slice %0 {offsets = [0, 7], sizes = [8, 1], strides = [1, 1]} : vector<8x8xi32> to vector<8x1xi32>
    %43 = vector.broadcast %42 : vector<8x1xi32> to vector<8x128xi32>
    %44 = arith.cmpi eq, %43, %3 : vector<8x128xi32>
    %45 = arith.extui %44 : vector<8x128xi1> to vector<8x128xi32>
    %46 = arith.sitofp %45 : vector<8x128xi32> to vector<8x128xf32>
    %47 = tpu.concatenate %11, %16, %21, %26, %31, %36, %41, %46 in 0 : vector<8x128xf32>, vector<8x128xf32>, vector<8x128xf32>, vector<8x128xf32>, vector<8x128xf32>, vector<8x128xf32>, vector<8x128xf32>, vector<8x128xf32> -> vector<64x128xf32>
    %48 = arith.truncf %47 : vector<64x128xf32> to vector<64x128xbf16>
    %cst = arith.constant dense<0.000000e+00> : vector<64x384xf32>
    %49 = tpu.matmul %48, %1, %cst {dimension_numbers = #tpu.dot_dimension_numbers<[1], [0], [0], [1], [0, 0, 1, 1], [], []>} : vector<64x128xbf16>, vector<128x384xbf16>, vector<64x384xf32> -> vector<64x384xf32>
    %50 = vector.shape_cast %49 : vector<64x384xf32> to vector<8x8x384xf32>
    %c0_7 = arith.constant 0 : index
    %c0_8 = arith.constant 0 : index
    %c0_9 = arith.constant 0 : index
    %51 = vector.load %arg6[%c0_7, %c0_8, %c0_9] : memref<8x8x384xf32, #tpu.memory_space<vmem>>, vector<8x8x384xf32>
    tpu.vector_store %arg6[%c0_7, %c0_8, %c0_9], %50 {strides = array<i32>} : memref<8x8x384xf32, #tpu.memory_space<vmem>>, vector<8x8x384xf32>,
    %cst_10 = arith.constant 0.000000e+00 : f32
    %52 = vector.broadcast %cst_10 : f32 to vector<8x128xf32>
    %c0_i32 = arith.constant 0 : i32
    %c8_i32 = arith.constant 8 : i32
    %53 = arith.addi %c0_i32, %c8_i32 : i32
    %c1_i32 = arith.constant 1 : i32
    %54 = scf.for %arg7 = %c0_i32 to %53 step %c1_i32 iter_args(%arg8 = %52) -> (vector<8x128xf32>)  : i32 {
      %56 = arith.index_cast %arg7 : i32 to index
      %c0_14 = arith.constant 0 : index
      %c0_15 = arith.constant 0 : index
      %57 = vector.load %arg6[%56, %c0_14, %c0_15] : memref<8x8x384xf32, #tpu.memory_space<vmem>>, vector<1x8x384xf32>
      %58 = vector.shape_cast %57 : vector<1x8x384xf32> to vector<8x384xf32>
      %59 = arith.truncf %arg8 : vector<8x128xf32> to vector<8x128xbf16>
      %cst_16 = arith.constant dense<0.000000e+00> : vector<8x384xf32>
      %60 = tpu.matmul %59, %2, %cst_16 {dimension_numbers = #tpu.dot_dimension_numbers<[1], [0], [0], [1], [0, 0, 1, 1], [], []>} : vector<8x128xbf16>, vector<128x384xbf16>, vector<8x384xf32> -> vector<8x384xf32>
      %61 = vector.extract_strided_slice %58 {offsets = [0, 0], sizes = [8, 128], strides = [1, 1]} : vector<8x384xf32> to vector<8x128xf32>
      %62 = vector.extract_strided_slice %60 {offsets = [0, 0], sizes = [8, 128], strides = [1, 1]} : vector<8x384xf32> to vector<8x128xf32>
      %63 = arith.addf %61, %62 : vector<8x128xf32>
      %64 = arith.negf %63 : vector<8x128xf32>
      %65 = math.exp %64 : vector<8x128xf32>
      %cst_17 = arith.constant 1.000000e+00 : f32
      %66 = vector.broadcast %cst_17 : f32 to vector<8x128xf32>
      %67 = arith.addf %66, %65 : vector<8x128xf32>
      %68 = arith.divf %66, %67 : vector<8x128xf32>
      %69 = vector.extract_strided_slice %58 {offsets = [0, 128], sizes = [8, 128], strides = [1, 1]} : vector<8x384xf32> to vector<8x128xf32>
      %70 = vector.extract_strided_slice %60 {offsets = [0, 128], sizes = [8, 128], strides = [1, 1]} : vector<8x384xf32> to vector<8x128xf32>
      %71 = arith.addf %69, %70 : vector<8x128xf32>
      %72 = arith.negf %71 : vector<8x128xf32>
      %73 = math.exp %72 : vector<8x128xf32>
      %cst_18 = arith.constant 1.000000e+00 : f32
      %74 = vector.broadcast %cst_18 : f32 to vector<8x128xf32>
      %75 = arith.addf %74, %73 : vector<8x128xf32>
      %76 = arith.divf %74, %75 : vector<8x128xf32>
      %77 = vector.extract_strided_slice %58 {offsets = [0, 256], sizes = [8, 128], strides = [1, 1]} : vector<8x384xf32> to vector<8x128xf32>
      %78 = vector.extract_strided_slice %60 {offsets = [0, 256], sizes = [8, 128], strides = [1, 1]} : vector<8x384xf32> to vector<8x128xf32>
      %79 = arith.addf %78, %6 : vector<8x128xf32>
      %80 = arith.mulf %68, %79 : vector<8x128xf32>
      %81 = arith.addf %77, %80 : vector<8x128xf32>
      %82 = math.tanh %81 : vector<8x128xf32>
      %cst_19 = arith.constant 1.000000e+00 : f32
      %83 = vector.broadcast %cst_19 : f32 to vector<8x128xf32>
      %84 = arith.subf %83, %76 : vector<8x128xf32>
      %85 = arith.mulf %84, %82 : vector<8x128xf32>
      %86 = arith.mulf %76, %arg8 : vector<8x128xf32>
      %87 = arith.addf %85, %86 : vector<8x128xf32>
      scf.yield %87 : vector<8x128xf32>
    }
    %c8_i32_11 = arith.constant 8 : i32
    %c0_12 = arith.constant 0 : index
    %c0_13 = arith.constant 0 : index
    %55 = vector.load %arg5[%c0_12, %c0_13] : memref<8x128xf32, #tpu.memory_space<vmem>>, vector<8x128xf32>
    tpu.vector_store %arg5[%c0_12, %c0_13], %54 {strides = array<i32>} : memref<8x128xf32, #tpu.memory_space<vmem>>, vector<8x128xf32>,
    return
  }
  func.func @transform_0(%arg0: i32) -> (i32, i32) {
    %c0_i32 = arith.constant 0 : i32
    %c0_i32_0 = arith.constant 0 : i32
    return %arg0, %c0_i32 : i32, i32
  }
  func.func @transform_1(%arg0: i32) -> (i32, i32) {
    %c0_i32 = arith.constant 0 : i32
    %c0_i32_0 = arith.constant 0 : i32
    %c0_i32_1 = arith.constant 0 : i32
    return %c0_i32, %c0_i32_0 : i32, i32
  }
  func.func @transform_2(%arg0: i32) -> (i32, i32) {
    %c0_i32 = arith.constant 0 : i32
    %c0_i32_0 = arith.constant 0 : i32
    %c0_i32_1 = arith.constant 0 : i32
    return %c0_i32, %c0_i32_0 : i32, i32
  }
  func.func @transform_3(%arg0: i32) -> (i32, i32) {
    %c0_i32 = arith.constant 0 : i32
    %c0_i32_0 = arith.constant 0 : i32
    %c0_i32_1 = arith.constant 0 : i32
    return %c0_i32, %c0_i32_0 : i32, i32
  }
  func.func @transform_4(%arg0: i32) -> (i32, i32) {
    %c0_i32 = arith.constant 0 : i32
    %c0_i32_0 = arith.constant 0 : i32
    return %arg0, %c0_i32 : i32, i32
  }
}

</mosaic_0001>

<llo_original>
// kernel: tpu_custom_call.1
$region0: #{tpu_custom_call.1}
  #allocation0 [shape = 'u32[]', space=smem, size = 0x4, offset = 0x4, fixed_abs, tag = 'smem constant byte address 0x4 - core index']
  #allocation1 [shape = 'u32[72,128]{1,0:T(1,128)}', space=vmem, size = 0x9000, scoped, tag = 'internal scratch']
  #allocation2 [shape = 'f32[8,8,384]{2,1,0:T(8,128)}', space=vmem, size = 0x18000, scoped, tag = 'scratch operand']
  %s0 = inlined_call_operand.vmem [shape: s32[16,8], index: 0, kind: input, shape index: {}]
  %s1 = inlined_call_operand.hbm [shape: bf16[128,384], index: 1, kind: input, shape index: {}]
  %s2 = inlined_call_operand.hbm [shape: bf16[128,384], index: 2, kind: input, shape index: {}]
  %s3 = inlined_call_operand.vmem [shape: f32[1,128], index: 3, kind: input, shape index: {}]
  %s4 = inlined_call_operand.hbm [shape: f32[16,128], index: 4, kind: output, shape index: {}]
  %s5 = sld [smem:[#allocation0]]
  $region64: #{tpu_custom_call.1} parent=0
    _
  %s7 = ssub.s32 1, %s5
  %s8 = scalar_select 0, %s7, %s5
  $region1: #{tpu_custom_call.1} parent=0
    #allocation3 [shape = 'u8[98304]{0}', space=vmem, size = 0x18000, scoped, tag = 'input window, operand 1, single buffered']
    #allocation4 [shape = 's32[2]{0}', space=sflag, size = 0x8, scoped, tag = 'scoped memory for tpu_custom_call.1']
    #allocation5 [shape = 's32[2]{0}', space=sflag, size = 0x8, scoped, tag = 'scoped memory for tpu_custom_call.1']
    #allocation6 [shape = 'u8[98304]{0}', space=vmem, size = 0x18000, scoped, tag = 'input window, operand 2, single buffered']
    #allocation7 [shape = 's32[1]{0}', space=sflag, size = 0x4, scoped, tag = 'scoped memory for tpu_custom_call.1']
    #allocation8 [shape = 'u8[8192]{0}', space=vmem, size = 0x2000, scoped, tag = 'output window, operand 0']
    %9 = vsyncpa [#allocation4], 0
    %10 = vsyncpa [#allocation7], 0
    %11 = vsyncpa [#allocation5], 0
    %s12 = scalar_lea.sflag [#allocation5], 1
    %13 = vsyncpa %s12, 0
    loop: start=0, step=1, limit=4
    $region2: #{tpu_custom_call.1} parent=1 // loop_pre_header
      _
    $region3: #{tpu_custom_call.1} parent=1 // loop_header
      %s15 = sphi 0, %s19
      %p16 = scmp.ge.s32.totalorder %s15, 4
      %s25 = sphi 0, %s27
      %s28 = sphi 0, %s25
      %s29 = sphi 0, %s28
      %s45 = sphi 0, %s29
      %s49 = sphi 0, %s49
      %s51 = sphi 0, %s49
      %s52 = sphi 0, %s51
      %s66 = sphi 0, %s52
      %s70 = sphi 0, %s70
      %s72 = sphi 0, %s70
      %s73 = sphi 0, %s72
      %s87 = sphi 0, %s73
      %s91 = sphi 0, %s91
      %s93 = sphi 0, %s91
      %s94 = sphi 0, %s93
      %s108 = sphi 0, %s94
      %s114 = sphi 0, %s116
      %s117 = sphi 0, %s114
      %s118 = sphi 0, %s117
      %s134 = sphi 0, %s118
    $region4: #{tpu_custom_call.1} parent=1 // loop_header_branch
      %18 = sbr.rel (%p16) target = $region8
    $region5: #{tpu_custom_call.1} parent=1 // loop_body
      %s20 = ssub.s32 %s15, 1
      %s21 = ssub.s32 %s15, 2
      %s22 = sadd.s32 %s15, 1
      %s23 = ssub.s32 %s15, %s22
      %p24 = scmp.eq.s32.totalorder %s23, 0
      %s26 = sadd.s32 %s25, 1
      %s27 = scalar_select %p24, %s25, %s26
      %p30 = pneg %p24
      %p31 = scmp.eq.s32.totalorder %s15, 1
      %p32 = por %p30, %p31
      %p33 = scmp.ne.s32.totalorder %s25, %s28
      %p34 = scmp.eq.s32.totalorder %s15, 0
      %p35 = por %p33, %p34
      %p36 = scmp.ne.s32.totalorder %s25, %s28
      %p37 = scmp.eq.s32.totalorder %s20, 1
      %p38 = por %p36, %p37
      %p39 = scmp.ne.s32.totalorder %s28, %s29
      %p40 = scmp.eq.s32.totalorder %s20, 0
      %p41 = por %p39, %p40
      %p42 = scmp.ne.s32.totalorder %s28, %s29
      %p43 = scmp.eq.s32.totalorder %s21, 1
      %p44 = por %p42, %p43
      %p46 = scmp.ne.s32.totalorder %s29, %s45
      %p47 = scmp.eq.s32.totalorder %s21, 0
      %p48 = por %p46, %p47
      %s50 = sadd.s32 %s49, 1
      %p53 = scmp.eq.s32.totalorder %s15, 1
      %p54 = scmp.ne.s32.totalorder %s49, %s51
      %p55 = scmp.eq.s32.totalorder %s15, 0
      %p56 = por %p54, %p55
      %p57 = scmp.ne.s32.totalorder %s49, %s51
      %p58 = scmp.eq.s32.totalorder %s20, 1
      %p59 = por %p57, %p58
      %p60 = scmp.ne.s32.totalorder %s51, %s52
      %p61 = scmp.eq.s32.totalorder %s20, 0
      %p62 = por %p60, %p61
      %p63 = scmp.ne.s32.totalorder %s51, %s52
      %p64 = scmp.eq.s32.totalorder %s21, 1
      %p65 = por %p63, %p64
      %p67 = scmp.ne.s32.totalorder %s52, %s66
      %p68 = scmp.eq.s32.totalorder %s21, 0
      %p69 = por %p67, %p68
      %s71 = sadd.s32 %s70, 1
      %p74 = scmp.eq.s32.totalorder %s15, 1
      %p75 = scmp.ne.s32.totalorder %s70, %s72
      %p76 = scmp.eq.s32.totalorder %s15, 0
      %p77 = por %p75, %p76
      %p78 = scmp.ne.s32.totalorder %s70, %s72
      %p79 = scmp.eq.s32.totalorder %s20, 1
      %p80 = por %p78, %p79
      %p81 = scmp.ne.s32.totalorder %s72, %s73
      %p82 = scmp.eq.s32.totalorder %s20, 0
      %p83 = por %p81, %p82
      %p84 = scmp.ne.s32.totalorder %s72, %s73
      %p85 = scmp.eq.s32.totalorder %s21, 1
      %p86 = por %p84, %p85
      %p88 = scmp.ne.s32.totalorder %s73, %s87
      %p89 = scmp.eq.s32.totalorder %s21, 0
      %p90 = por %p88, %p89
      %s92 = sadd.s32 %s91, 1
      %p95 = scmp.eq.s32.totalorder %s15, 1
      %p96 = scmp.ne.s32.totalorder %s91, %s93
      %p97 = scmp.eq.s32.totalorder %s15, 0
      %p98 = por %p96, %p97
      %p99 = scmp.ne.s32.totalorder %s91, %s93
      %p100 = scmp.eq.s32.totalorder %s20, 1
      %p101 = por %p99, %p100
      %p102 = scmp.ne.s32.totalorder %s93, %s94
      %p103 = scmp.eq.s32.totalorder %s20, 0
      %p104 = por %p102, %p103
      %p105 = scmp.ne.s32.totalorder %s93, %s94
      %p106 = scmp.eq.s32.totalorder %s21, 1
      %p107 = por %p105, %p106
      %p109 = scmp.ne.s32.totalorder %s94, %s108
      %p110 = scmp.eq.s32.totalorder %s21, 0
      %p111 = por %p109, %p110
      %s112 = ssub.s32 %s15, %s22
      %p113 = scmp.eq.s32.totalorder %s112, 0
      %s115 = sadd.s32 %s114, 1
      %s116 = scalar_select %p113, %s114, %s115
      %p119 = pneg %p113
      %p120 = scmp.eq.s32.totalorder %s15, 1
      %p121 = por %p119, %p120
      %p122 = scmp.ne.s32.totalorder %s114, %s117
      %p123 = scmp.eq.s32.totalorder %s15, 0
      %p124 = por %p122, %p123
      %p125 = scmp.ne.s32.totalorder %s114, %s117
      %p126 = scmp.eq.s32.totalorder %s20, 1
      %p127 = por %p125, %p126
      %p128 = scmp.ne.s32.totalorder %s117, %s118
      %p129 = scmp.eq.s32.totalorder %s20, 0
      %p130 = por %p128, %p129
      %p131 = scmp.ne.s32.totalorder %s117, %s118
      %p132 = scmp.eq.s32.totalorder %s21, 1
      %p133 = por %p131, %p132
      %p135 = scmp.ne.s32.totalorder %s118, %s134
      %p136 = scmp.eq.s32.totalorder %s21, 0
      %p137 = por %p135, %p136
      %p138 = scmp.le.s32.totalorder 1, %s15
      %p139 = scmp.lt.s32.totalorder %s15, 3
      %p140 = pnand %p138, %p139
      %p141 = pneg %p140
      // Predicated region
      $region9: #{tpu_custom_call.1} parent=5 // pred_check
        _
      $region10: #{tpu_custom_call.1} parent=5 // pred_check_branch
        %143 = sbr.rel (%p140) target = $region12
      $region11: #{tpu_custom_call.1} parent=5 // pred_region
        %s144 = ssub.s32 %s15, 1
        // Predicated region
        $region13: #{tpu_custom_call.1} parent=11 // pred_check
          %p145 = pneg %p62
        $region14: #{tpu_custom_call.1} parent=11 // pred_check_branch
          %147 = sbr.rel (%p145) target = $region16
        $region15: #{tpu_custom_call.1} parent=11 // pred_region
          %149 = vsyncadd [#allocation4], 0
          %s150 = sshll.u32 %s1, 4
          %s151 = int_to_ptr.hbm [resolvable:$true] %s150
          %s152 = sshll.u32 [#allocation3], 4
          %s153 = int_to_ptr.vmem [resolvable:$true] %s152
          %158 = dma.hbm_to_vmem [thread:$0]  %s151, 3072, %s153, [#allocation4], 192, 192, 12
        $region16: #{tpu_custom_call.1} parent=11 // pred_fallthru
          _
        // Predicated region
        $region17: #{tpu_custom_call.1} parent=11 // pred_check
          %p159 = pneg %p83
        $region18: #{tpu_custom_call.1} parent=11 // pred_check_branch
          %161 = sbr.rel (%p159) target = $region20
        $region19: #{tpu_custom_call.1} parent=11 // pred_region
          %163 = vsyncadd [#allocation7], 0
          %s164 = sshll.u32 %s2, 4
          %s165 = int_to_ptr.hbm [resolvable:$true] %s164
          %s166 = sshll.u32 [#allocation6], 4
          %s167 = int_to_ptr.vmem [resolvable:$true] %s166
          %172 = dma.hbm_to_vmem [thread:$0]  %s165, 3072, %s167, [#allocation7], 192, 192, 12
        $region20: #{tpu_custom_call.1} parent=11 // pred_fallthru
          _
        // Predicated region
        $region21: #{tpu_custom_call.1} parent=11 // pred_check
          %p173 = pneg %p104
        $region22: #{tpu_custom_call.1} parent=11 // pred_check_branch
          %175 = sbr.rel (%p173) target = $region24
        $region23: #{tpu_custom_call.1} parent=11 // pred_region
          _
        $region24: #{tpu_custom_call.1} parent=11 // pred_fallthru
          _
      $region12: #{tpu_custom_call.1} parent=5 // pred_fallthru
        _
      %p176 = scmp.lt.s32.totalorder %s15, 2
      // Predicated region
      $region25: #{tpu_custom_call.1} parent=5 // pred_check
        %p177 = pneg %p176
      $region26: #{tpu_custom_call.1} parent=5 // pred_check_branch
        %179 = sbr.rel (%p177) target = $region28
      $region27: #{tpu_custom_call.1} parent=5 // pred_region
        // Predicated region
        $region29: #{tpu_custom_call.1} parent=27 // pred_check
          %p180 = pneg %p35
        $region30: #{tpu_custom_call.1} parent=27 // pred_check_branch
          %182 = sbr.rel (%p180) target = $region32
        $region31: #{tpu_custom_call.1} parent=27 // pred_region
          %p183 = scmp.lt.s32.totalorder %s15, 1
          %s184 = scalar_select %p183, %s15, 1
          %s185 = smul.addr %s184, 8
          %s186 = scalar_lea.vmem %s0, %s185
        $region32: #{tpu_custom_call.1} parent=27 // pred_fallthru
          _
      $region28: #{tpu_custom_call.1} parent=5 // pred_fallthru
        _
      %p187 = scmp.le.s32.totalorder 1, %s15
      %p188 = scmp.lt.s32.totalorder %s15, 3
      %p189 = pnand %p187, %p188
      %p190 = pneg %p189
      // Predicated region
      $region33: #{tpu_custom_call.1} parent=5 // pred_check
        _
      $region34: #{tpu_custom_call.1} parent=5 // pred_check_branch
        %192 = sbr.rel (%p189) target = $region36
      $region35: #{tpu_custom_call.1} parent=5 // pred_region
        %s193 = ssub.s32 %s15, 1
        // Predicated region
        $region37: #{tpu_custom_call.1} parent=35 // pred_check
          %p194 = pneg %p62
        $region38: #{tpu_custom_call.1} parent=35 // pred_check_branch
          %196 = sbr.rel (%p194) target = $region40
        $region39: #{tpu_custom_call.1} parent=35 // pred_region
          %198 = dma.done [#allocation4], 3072
        $region40: #{tpu_custom_call.1} parent=35 // pred_fallthru
          _
        // Predicated region
        $region41: #{tpu_custom_call.1} parent=35 // pred_check
          %p199 = pneg %p83
        $region42: #{tpu_custom_call.1} parent=35 // pred_check_branch
          %201 = sbr.rel (%p199) target = $region44
        $region43: #{tpu_custom_call.1} parent=35 // pred_region
          %203 = dma.done [#allocation7], 3072
        $region44: #{tpu_custom_call.1} parent=35 // pred_fallthru
          _
        %p204 = scmp.lt.s32.totalorder %s20, 1
        %s205 = scalar_select %p204, %s20, 1
        %s206 = smul.addr %s205, 8
        %s207 = scalar_lea.vmem %s0, %s206
        %p208 = pneg %p41
        %p209 = pneg %p38
        %p210 = pneg %p62
        %p211 = pneg %p59
        %p212 = pneg %p83
        %p213 = pneg %p80
        %p214 = pneg %p104
        %p215 = pneg %p101
        %p216 = pneg %p130
        %p217 = pneg %p127
        %s218 = sand.u32 %s117, 1
        %s219 = scalar_lea.sflag [#allocation5], %s218
        %s220 = sand.u32 %s117, 1
        %s221 = smul.addr %s220, 8
        %s222 = scalar_lea.vmem [#allocation8], %s221
        %p223 = scmp.lt.s32.totalorder %s20, 1
        %s224 = scalar_select %p223, %s20, 1
        %s225 = smul.addr %s224, 8
        %s226 = scalar_lea.vmem %s0, %s225
        %v227 = vld [vmem:[%s226] sm:$0xff]
        %v228 = vld [vmem:[#allocation3] sm:$0xff]
        %v229 = vld [vmem:[#allocation3 + $0x8] sm:$0xf]
        %v230 = vld [vmem:[#allocation3 + $0xc] sm:$0xff]
        %v231 = vld [vmem:[#allocation3 + $0x14] sm:$0xf]
        %v232 = vld [vmem:[#allocation3 + $0x18] sm:$0xff]
        %v233 = vld [vmem:[#allocation3 + $0x20] sm:$0xf]
        %v234 = vld [vmem:[#allocation3 + $0x24] sm:$0xff]
        %v235 = vld [vmem:[#allocation3 + $0x2c] sm:$0xf]
        %v236 = vld [vmem:[#allocation3 + $0x30] sm:$0xff]
        %v237 = vld [vmem:[#allocation3 + $0x38] sm:$0xf]
        %v238 = vld [vmem:[#allocation3 + $0x3c] sm:$0xff]
        %v239 = vld [vmem:[#allocation3 + $0x44] sm:$0xf]
        %v240 = vld [vmem:[#allocation3 + $0x48] sm:$0xff]
        %v241 = vld [vmem:[#allocation3 + $0x50] sm:$0xf]
        %v242 = vld [vmem:[#allocation3 + $0x54] sm:$0xff]
        %v243 = vld [vmem:[#allocation3 + $0x5c] sm:$0xf]
        %v244 = vld [vmem:[#allocation3 + $0x60] sm:$0xff]
        %v245 = vld [vmem:[#allocation3 + $0x68] sm:$0xf]
        %v246 = vld [vmem:[#allocation3 + $0x6c] sm:$0xff]
        %v247 = vld [vmem:[#allocation3 + $0x74] sm:$0xf]
        %v248 = vld [vmem:[#allocation3 + $0x78] sm:$0xff]
        %v249 = vld [vmem:[#allocation3 + $0x80] sm:$0xf]
        %v250 = vld [vmem:[#allocation3 + $0x84] sm:$0xff]
        %v251 = vld [vmem:[#allocation3 + $0x8c] sm:$0xf]
        %v252 = vld [vmem:[#allocation3 + $0x90] sm:$0xff]
        %v253 = vld [vmem:[#allocation3 + $0x98] sm:$0xf]
        %v254 = vld [vmem:[#allocation3 + $0x9c] sm:$0xff]
        %v255 = vld [vmem:[#allocation3 + $0xa4] sm:$0xf]
        %v256 = vld [vmem:[#allocation3 + $0xa8] sm:$0xff]
        %v257 = vld [vmem:[#allocation3 + $0xb0] sm:$0xf]
        %v258 = vld [vmem:[#allocation3 + $0xb4] sm:$0xff]
        %v259 = vld [vmem:[#allocation3 + $0xbc] sm:$0xf]
        %v260 = vld [vmem:[#allocation6] sm:$0xff]
        %v261 = vld [vmem:[#allocation6 + $0x8] sm:$0xf]
        %v262 = vld [vmem:[#allocation6 + $0xc] sm:$0xff]
        %v263 = vld [vmem:[#allocation6 + $0x14] sm:$0xf]
        %v264 = vld [vmem:[#allocation6 + $0x18] sm:$0xff]
        %v265 = vld [vmem:[#allocation6 + $0x20] sm:$0xf]
        %v266 = vld [vmem:[#allocation6 + $0x24] sm:$0xff]
        %v267 = vld [vmem:[#allocation6 + $0x2c] sm:$0xf]
        %v268 = vld [vmem:[#allocation6 + $0x30] sm:$0xff]
        %v269 = vld [vmem:[#allocation6 + $0x38] sm:$0xf]
        %v270 = vld [vmem:[#allocation6 + $0x3c] sm:$0xff]
        %v271 = vld [vmem:[#allocation6 + $0x44] sm:$0xf]
        %v272 = vld [vmem:[#allocation6 + $0x48] sm:$0xff]
        %v273 = vld [vmem:[#allocation6 + $0x50] sm:$0xf]
        %v274 = vld [vmem:[#allocation6 + $0x54] sm:$0xff]
        %v275 = vld [vmem:[#allocation6 + $0x5c] sm:$0xf]
        %v276 = vld [vmem:[#allocation6 + $0x60] sm:$0xff]
        %v277 = vld [vmem:[#allocation6 + $0x68] sm:$0xf]
        %v278 = vld [vmem:[#allocation6 + $0x6c] sm:$0xff]
        %v279 = vld [vmem:[#allocation6 + $0x74] sm:$0xf]
        %v280 = vld [vmem:[#allocation6 + $0x78] sm:$0xff]
        %v281 = vld [vmem:[#allocation6 + $0x80] sm:$0xf]
        %v282 = vld [vmem:[#allocation6 + $0x84] sm:$0xff]
        %v283 = vld [vmem:[#allocation6 + $0x8c] sm:$0xf]
        %v284 = vld [vmem:[#allocation6 + $0x90] sm:$0xff]
        %v285 = vld [vmem:[#allocation6 + $0x98] sm:$0xf]
        %v286 = vld [vmem:[#allocation6 + $0x9c] sm:$0xff]
        %v287 = vld [vmem:[#allocation6 + $0xa4] sm:$0xf]
        %v288 = vld [vmem:[#allocation6 + $0xa8] sm:$0xff]
        %v289 = vld [vmem:[#allocation6 + $0xb0] sm:$0xf]
        %v290 = vld [vmem:[#allocation6 + $0xb4] sm:$0xff]
        %v291 = vld [vmem:[#allocation6 + $0xbc] sm:$0xf]
        %v292 = vlaneseq
        %v293 = vand.u32 %v292, 127
        %v294 = vld [vmem:[%s3] sm:$0x1]
        %v296 = vperm.slane %v294, 0
        %298 = vset.pattern.permute.xlu0 0
        %299 = vperm.xlu0 %298, %v227
        %v300 = vpop.permute.xlu0 %299
        %vm301 = vcmp.eq.s32.totalorder %v300, %v293
        %v302 = vsel %vm301, 1, 0
        %v303 = vcvt.s32.f32 %v302
        %304 = vset.pattern.permute.xlu0 1
        %305 = vperm.xlu0 %304, %v227
        %v306 = vpop.permute.xlu0 %305
        %vm307 = vcmp.eq.s32.totalorder %v306, %v293
        %v308 = vsel %vm307, 1, 0
        %v309 = vcvt.s32.f32 %v308
        %310 = vset.pattern.permute.xlu0 2
        %311 = vperm.xlu0 %310, %v227
        %v312 = vpop.permute.xlu0 %311
        %vm313 = vcmp.eq.s32.totalorder %v312, %v293
        %v314 = vsel %vm313, 1, 0
        %v315 = vcvt.s32.f32 %v314
        %316 = vset.pattern.permute.xlu0 3
        %317 = vperm.xlu0 %316, %v227
        %v318 = vpop.permute.xlu0 %317
        %vm319 = vcmp.eq.s32.totalorder %v318, %v293
        %v320 = vsel %vm319, 1, 0
        %v321 = vcvt.s32.f32 %v320
        %322 = vset.pattern.permute.xlu0 4
        %323 = vperm.xlu0 %322, %v227
        %v324 = vpop.permute.xlu0 %323
        %vm325 = vcmp.eq.s32.totalorder %v324, %v293
        %v326 = vsel %vm325, 1, 0
        %v327 = vcvt.s32.f32 %v326
        %328 = vset.pattern.permute.xlu0 5
        %329 = vperm.xlu0 %328, %v227
        %v330 = vpop.permute.xlu0 %329
        %vm331 = vcmp.eq.s32.totalorder %v330, %v293
        %v332 = vsel %vm331, 1, 0
        %v333 = vcvt.s32.f32 %v332
        %334 = vset.pattern.permute.xlu0 6
        %335 = vperm.xlu0 %334, %v227
        %v336 = vpop.permute.xlu0 %335
        %vm337 = vcmp.eq.s32.totalorder %v336, %v293
        %v338 = vsel %vm337, 1, 0
        %v339 = vcvt.s32.f32 %v338
        %340 = vset.pattern.permute.xlu0 7
        %341 = vperm.xlu0 %340, %v227
        %v342 = vpop.permute.xlu0 %341
        %vm343 = vcmp.eq.s32.totalorder %v342, %v293
        %v344 = vsel %vm343, 1, 0
        %v345 = vcvt.s32.f32 %v344
        %v346 = vpack.c.bf16 %v309, %v303
        %v347 = vpack.c.bf16 %v321, %v315
        %v348 = vpack.c.bf16 %v333, %v327
        %v349 = vpack.c.bf16 %v345, %v339
        %v382 = vunpack.c.l.b16 %v228
        %v383 = vunpack.c.h.b16 %v228
        %v384 = vunpack.c.l.b16 %v229
        %v385 = vunpack.c.l.b16 %v230
        %v386 = vunpack.c.h.b16 %v230
        %v387 = vunpack.c.l.b16 %v231
        %v388 = vunpack.c.l.b16 %v232
        %v389 = vunpack.c.h.b16 %v232
        %v390 = vunpack.c.l.b16 %v233
        %v391 = vunpack.c.l.b16 %v234
        %v392 = vunpack.c.h.b16 %v234
        %v393 = vunpack.c.l.b16 %v235
        %v394 = vunpack.c.l.b16 %v236
        %v395 = vunpack.c.h.b16 %v236
        %v396 = vunpack.c.l.b16 %v237
        %v397 = vunpack.c.l.b16 %v238
        %v398 = vunpack.c.h.b16 %v238
        %v399 = vunpack.c.l.b16 %v239
        %v400 = vunpack.c.l.b16 %v240
        %v401 = vunpack.c.h.b16 %v240
        %v402 = vunpack.c.l.b16 %v241
        %v403 = vunpack.c.l.b16 %v242
        %v404 = vunpack.c.h.b16 %v242
        %v405 = vunpack.c.l.b16 %v243
        %v406 = vunpack.c.l.b16 %v244
        %v407 = vunpack.c.h.b16 %v244
        %v408 = vunpack.c.l.b16 %v245
        %v409 = vunpack.c.l.b16 %v246
        %v410 = vunpack.c.h.b16 %v246
        %v411 = vunpack.c.l.b16 %v247
        %v412 = vunpack.c.l.b16 %v248
        %v413 = vunpack.c.h.b16 %v248
        %v414 = vunpack.c.l.b16 %v249
        %v415 = vunpack.c.l.b16 %v250
        %v416 = vunpack.c.h.b16 %v250
        %v417 = vunpack.c.l.b16 %v251
        %v418 = vunpack.c.l.b16 %v252
        %v419 = vunpack.c.h.b16 %v252
        %v420 = vunpack.c.l.b16 %v253
        %v421 = vunpack.c.l.b16 %v254
        %v422 = vunpack.c.h.b16 %v254
        %v423 = vunpack.c.l.b16 %v255
        %v424 = vunpack.c.l.b16 %v256
        %v425 = vunpack.c.h.b16 %v256
        %v426 = vunpack.c.l.b16 %v257
        %v427 = vunpack.c.l.b16 %v258
        %v428 = vunpack.c.h.b16 %v258
        %v429 = vunpack.c.l.b16 %v259
        %v430 = vpack.c.b16 %v385, %v382
        %v431 = vpack.c.b16 %v386, %v383
        %v432 = vpack.c.b16 %v387, %v384
        %v433 = vpack.c.b16 %v391, %v388
        %v434 = vpack.c.b16 %v392, %v389
        %v435 = vpack.c.b16 %v393, %v390
        %v436 = vpack.c.b16 %v397, %v394
        %v437 = vpack.c.b16 %v398, %v395
        %v438 = vpack.c.b16 %v399, %v396
        %v439 = vpack.c.b16 %v403, %v400
        %v440 = vpack.c.b16 %v404, %v401
        %v441 = vpack.c.b16 %v405, %v402
        %v442 = vpack.c.b16 %v409, %v406
        %v443 = vpack.c.b16 %v410, %v407
        %v444 = vpack.c.b16 %v411, %v408
        %v445 = vpack.c.b16 %v415, %v412
        %v446 = vpack.c.b16 %v416, %v413
        %v447 = vpack.c.b16 %v417, %v414
        %v448 = vpack.c.b16 %v421, %v418
        %v449 = vpack.c.b16 %v422, %v419
        %v450 = vpack.c.b16 %v423, %v420
        %v451 = vpack.c.b16 %v427, %v424
        %v452 = vpack.c.b16 %v428, %v425
        %v453 = vpack.c.b16 %v429, %v426
        %478 = vmatpush.bf16.msra.mxu0 %v451
        %479 = vmatpush.bf16.msra.mxu0 %v448
        %480 = vmatpush.bf16.msra.mxu0 %v445
        %481 = vmatpush.bf16.msra.mxu0 %v442
        %482 = vmatpush.bf16.msra.mxu0 %v439
        %483 = vmatpush.bf16.msra.mxu0 %v436
        %484 = vmatpush.bf16.msra.mxu0 %v433
        %485 = vmatpush.bf16.msra.mxu0 %v430
        %486 = vmatmul.bf16.gmra.mxu0 %v346
        %v487 = vpop.f32.mrf.mxu0
        %v488 = vadd.f32 0.0, %v487
        %v489 = vpop.f32.mrf.mxu0
        %v490 = vadd.f32 0.0, %v489
        %491 = vmatmul.bf16.gmra.mxu0 %v347
        %v492 = vpop.f32.mrf.mxu0
        %v493 = vadd.f32 0.0, %v492
        %v494 = vpop.f32.mrf.mxu0
        %v495 = vadd.f32 0.0, %v494
        %496 = vmatmul.bf16.gmra.mxu0 %v348
        %v497 = vpop.f32.mrf.mxu0
        %v498 = vadd.f32 0.0, %v497
        %v499 = vpop.f32.mrf.mxu0
        %v500 = vadd.f32 0.0, %v499
        %501 = vmatmul.bf16.gmra.mxu0 %v349
        %v502 = vpop.f32.mrf.mxu0
        %v503 = vadd.f32 0.0, %v502
        %v504 = vpop.f32.mrf.mxu0
        %v505 = vadd.f32 0.0, %v504
        %506 = vdwg.mxu0
        %507 = vmatpush.bf16.msra.mxu0 %v452
        %508 = vmatpush.bf16.msra.mxu0 %v449
        %509 = vmatpush.bf16.msra.mxu0 %v446
        %510 = vmatpush.bf16.msra.mxu0 %v443
        %511 = vmatpush.bf16.msra.mxu0 %v440
        %512 = vmatpush.bf16.msra.mxu0 %v437
        %513 = vmatpush.bf16.msra.mxu0 %v434
        %514 = vmatpush.bf16.msra.mxu0 %v431
        %515 = vmatmul.bf16.gmra.mxu0 %v346
        %v516 = vpop.f32.mrf.mxu0
        %v517 = vadd.f32 0.0, %v516
        %v518 = vpop.f32.mrf.mxu0
        %v519 = vadd.f32 0.0, %v518
        %520 = vmatmul.bf16.gmra.mxu0 %v347
        %v521 = vpop.f32.mrf.mxu0
        %v522 = vadd.f32 0.0, %v521
        %v523 = vpop.f32.mrf.mxu0
        %v524 = vadd.f32 0.0, %v523
        %525 = vmatmul.bf16.gmra.mxu0 %v348
        %v526 = vpop.f32.mrf.mxu0
        %v527 = vadd.f32 0.0, %v526
        %v528 = vpop.f32.mrf.mxu0
        %v529 = vadd.f32 0.0, %v528
        %530 = vmatmul.bf16.gmra.mxu0 %v349
        %v531 = vpop.f32.mrf.mxu0
        %v532 = vadd.f32 0.0, %v531
        %v533 = vpop.f32.mrf.mxu0
        %v534 = vadd.f32 0.0, %v533
        %535 = vdwg.mxu0
        %536 = vmatpush.bf16.msra.mxu0 %v453
        %537 = vmatpush.bf16.msra.mxu0 %v450
        %538 = vmatpush.bf16.msra.mxu0 %v447
        %539 = vmatpush.bf16.msra.mxu0 %v444
        %540 = vmatpush.bf16.msra.mxu0 %v441
        %541 = vmatpush.bf16.msra.mxu0 %v438
        %542 = vmatpush.bf16.msra.mxu0 %v435
        %543 = vmatpush.bf16.msra.mxu0 %v432
        %544 = vmatmul.bf16.gmra.mxu0 %v346
        %v545 = vpop.f32.mrf.mxu0
        %v546 = vadd.f32 0.0, %v545
        %v547 = vpop.f32.mrf.mxu0
        %v548 = vadd.f32 0.0, %v547
        %549 = vmatmul.bf16.gmra.mxu0 %v347
        %v550 = vpop.f32.mrf.mxu0
        %v551 = vadd.f32 0.0, %v550
        %v552 = vpop.f32.mrf.mxu0
        %v553 = vadd.f32 0.0, %v552
        %554 = vmatmul.bf16.gmra.mxu0 %v348
        %v555 = vpop.f32.mrf.mxu0
        %v556 = vadd.f32 0.0, %v555
        %v557 = vpop.f32.mrf.mxu0
        %v558 = vadd.f32 0.0, %v557
        %559 = vmatmul.bf16.gmra.mxu0 %v349
        %v560 = vpop.f32.mrf.mxu0
        %v561 = vadd.f32 0.0, %v560
        %v562 = vpop.f32.mrf.mxu0
        %v563 = vadd.f32 0.0, %v562
        %564 = vdwg.mxu0
        %565 = vst [vmem:[#allocation2] sm:$0xff] %v488
        %566 = vst [vmem:[#allocation2 + $0x8] sm:$0xff] %v517
        %567 = vst [vmem:[#allocation2 + $0x10] sm:$0xff] %v546
        %568 = vst [vmem:[#allocation2 + $0x18] sm:$0xff] %v490
        %569 = vst [vmem:[#allocation2 + $0x20] sm:$0xff] %v519
        %570 = vst [vmem:[#allocation2 + $0x28] sm:$0xff] %v548
        %571 = vst [vmem:[#allocation2 + $0x30] sm:$0xff] %v493
        %572 = vst [vmem:[#allocation2 + $0x38] sm:$0xff] %v522
        %573 = vst [vmem:[#allocation2 + $0x40] sm:$0xff] %v551
        %574 = vst [vmem:[#allocation2 + $0x48] sm:$0xff] %v495
        %575 = vst [vmem:[#allocation2 + $0x50] sm:$0xff] %v524
        %576 = vst [vmem:[#allocation2 + $0x58] sm:$0xff] %v553
        %577 = vst [vmem:[#allocation2 + $0x60] sm:$0xff] %v498
        %578 = vst [vmem:[#allocation2 + $0x68] sm:$0xff] %v527
        %579 = vst [vmem:[#allocation2 + $0x70] sm:$0xff] %v556
        %580 = vst [vmem:[#allocation2 + $0x78] sm:$0xff] %v500
        %581 = vst [vmem:[#allocation2 + $0x80] sm:$0xff] %v529
        %582 = vst [vmem:[#allocation2 + $0x88] sm:$0xff] %v558
        %583 = vst [vmem:[#allocation2 + $0x90] sm:$0xff] %v503
        %584 = vst [vmem:[#allocation2 + $0x98] sm:$0xff] %v532
        %585 = vst [vmem:[#allocation2 + $0xa0] sm:$0xff] %v561
        %586 = vst [vmem:[#allocation2 + $0xa8] sm:$0xff] %v505
        %587 = vst [vmem:[#allocation2 + $0xb0] sm:$0xff] %v534
        %588 = vst [vmem:[#allocation2 + $0xb8] sm:$0xff] %v563
        loop: start=0, step=1, limit=8
        $region45: #{tpu_custom_call.1} parent=35 // loop_pre_header
          _
        $region46: #{tpu_custom_call.1} parent=35 // loop_header
          %s590 = sphi 0, %s594
          %p591 = scmp.ge.s32.totalorder %s590, 8
          %v595 = vphi 0.0, %v817
        $region47: #{tpu_custom_call.1} parent=35 // loop_header_branch
          %593 = sbr.rel (%p591) target = $region51
        $region48: #{tpu_custom_call.1} parent=35 // loop_body
          %s596 = smul.u32 %s590, 3
          %s597 = smul.addr %s596, 8
          %s598 = scalar_lea.vmem [#allocation2], %s597
          %v599 = vld [vmem:[%s598] sm:$0xff]
          %v600 = vld [vmem:[%s598 + $0x8] sm:$0xff]
          %v601 = vld [vmem:[%s598 + $0x10] sm:$0xff]
          %v602 = vpack.c.bf16 %v595, %v595
          %v635 = vunpack.c.l.b16 %v260
          %v636 = vunpack.c.h.b16 %v260
          %v637 = vunpack.c.l.b16 %v261
          %v638 = vunpack.c.l.b16 %v262
          %v639 = vunpack.c.h.b16 %v262
          %v640 = vunpack.c.l.b16 %v263
          %v641 = vunpack.c.l.b16 %v264
          %v642 = vunpack.c.h.b16 %v264
          %v643 = vunpack.c.l.b16 %v265
          %v644 = vunpack.c.l.b16 %v266
          %v645 = vunpack.c.h.b16 %v266
          %v646 = vunpack.c.l.b16 %v267
          %v647 = vunpack.c.l.b16 %v268
          %v648 = vunpack.c.h.b16 %v268
          %v649 = vunpack.c.l.b16 %v269
          %v650 = vunpack.c.l.b16 %v270
          %v651 = vunpack.c.h.b16 %v270
          %v652 = vunpack.c.l.b16 %v271
          %v653 = vunpack.c.l.b16 %v272
          %v654 = vunpack.c.h.b16 %v272
          %v655 = vunpack.c.l.b16 %v273
          %v656 = vunpack.c.l.b16 %v274
          %v657 = vunpack.c.h.b16 %v274
          %v658 = vunpack.c.l.b16 %v275
          %v659 = vunpack.c.l.b16 %v276
          %v660 = vunpack.c.h.b16 %v276
          %v661 = vunpack.c.l.b16 %v277
          %v662 = vunpack.c.l.b16 %v278
          %v663 = vunpack.c.h.b16 %v278
          %v664 = vunpack.c.l.b16 %v279
          %v665 = vunpack.c.l.b16 %v280
          %v666 = vunpack.c.h.b16 %v280
          %v667 = vunpack.c.l.b16 %v281
          %v668 = vunpack.c.l.b16 %v282
          %v669 = vunpack.c.h.b16 %v282
          %v670 = vunpack.c.l.b16 %v283
          %v671 = vunpack.c.l.b16 %v284
          %v672 = vunpack.c.h.b16 %v284
          %v673 = vunpack.c.l.b16 %v285
          %v674 = vunpack.c.l.b16 %v286
          %v675 = vunpack.c.h.b16 %v286
          %v676 = vunpack.c.l.b16 %v287
          %v677 = vunpack.c.l.b16 %v288
          %v678 = vunpack.c.h.b16 %v288
          %v679 = vunpack.c.l.b16 %v289
          %v680 = vunpack.c.l.b16 %v290
          %v681 = vunpack.c.h.b16 %v290
          %v682 = vunpack.c.l.b16 %v291
          %v683 = vpack.c.b16 %v638, %v635
          %v684 = vpack.c.b16 %v639, %v636
          %v685 = vpack.c.b16 %v640, %v637
          %v686 = vpack.c.b16 %v644, %v641
          %v687 = vpack.c.b16 %v645, %v642
          %v688 = vpack.c.b16 %v646, %v643
          %v689 = vpack.c.b16 %v650, %v647
          %v690 = vpack.c.b16 %v651, %v648
          %v691 = vpack.c.b16 %v652, %v649
          %v692 = vpack.c.b16 %v656, %v653
          %v693 = vpack.c.b16 %v657, %v654
          %v694 = vpack.c.b16 %v658, %v655
          %v695 = vpack.c.b16 %v662, %v659
          %v696 = vpack.c.b16 %v663, %v660
          %v697 = vpack.c.b16 %v664, %v661
          %v698 = vpack.c.b16 %v668, %v665
          %v699 = vpack.c.b16 %v669, %v666
          %v700 = vpack.c.b16 %v670, %v667
          %v701 = vpack.c.b16 %v674, %v671
          %v702 = vpack.c.b16 %v675, %v672
          %v703 = vpack.c.b16 %v676, %v673
          %v704 = vpack.c.b16 %v680, %v677
          %v705 = vpack.c.b16 %v681, %v678
          %v706 = vpack.c.b16 %v682, %v679
          %731 = vmatpush.bf16.msra.mxu0 %v704
          %732 = vmatpush.bf16.msra.mxu0 %v701
          %733 = vmatpush.bf16.msra.mxu0 %v698
          %734 = vmatpush.bf16.msra.mxu0 %v695
          %735 = vmatpush.bf16.msra.mxu0 %v692
          %736 = vmatpush.bf16.msra.mxu0 %v689
          %737 = vmatpush.bf16.msra.mxu0 %v686
          %738 = vmatpush.bf16.msra.mxu0 %v683
          %739 = vmatmul.bf16.gmra.mxu0 %v602
          %v740 = vpop.f32.mrf.mxu0
          %v741 = vadd.f32 0.0, %v740
          %v742 = vpop.f32.mrf.mxu0
          %743 = vdwg.mxu0
          %744 = vmatpush.bf16.msra.mxu0 %v705
          %745 = vmatpush.bf16.msra.mxu0 %v702
          %746 = vmatpush.bf16.msra.mxu0 %v699
          %747 = vmatpush.bf16.msra.mxu0 %v696
          %748 = vmatpush.bf16.msra.mxu0 %v693
          %749 = vmatpush.bf16.msra.mxu0 %v690
          %750 = vmatpush.bf16.msra.mxu0 %v687
          %751 = vmatpush.bf16.msra.mxu0 %v684
          %752 = vmatmul.bf16.gmra.mxu0 %v602
          %v753 = vpop.f32.mrf.mxu0
          %v754 = vadd.f32 0.0, %v753
          %v755 = vpop.f32.mrf.mxu0
          %756 = vdwg.mxu0
          %757 = vmatpush.bf16.msra.mxu0 %v706
          %758 = vmatpush.bf16.msra.mxu0 %v703
          %759 = vmatpush.bf16.msra.mxu0 %v700
          %760 = vmatpush.bf16.msra.mxu0 %v697
          %761 = vmatpush.bf16.msra.mxu0 %v694
          %762 = vmatpush.bf16.msra.mxu0 %v691
          %763 = vmatpush.bf16.msra.mxu0 %v688
          %764 = vmatpush.bf16.msra.mxu0 %v685
          %765 = vmatmul.bf16.gmra.mxu0 %v602
          %v766 = vpop.f32.mrf.mxu0
          %v767 = vadd.f32 0.0, %v766
          %v768 = vpop.f32.mrf.mxu0
          %769 = vdwg.mxu0
          %v770 = vadd.f32 %v599, %v741
          %v771 = vxor.u32 %v770, 2147483648
          %v772 = vmul.f32 %v771, 1.442695
          %v773 = vpow.pop %v772
          %v774 = vadd.f32 %v773, 1.0
          %v775 = vrcp.pop %v774
          %v776 = vmul.f32 %v774, %v775
          %v777 = vsub.f32 1.0, %v776
          %v778 = vmul.f32 %v775, %v777
          %v779 = vadd.f32 %v775, %v778
          %vm780 = vweird.f32 %v774
          %vm781 = vweird.f32 %v775
          %vm782 = vmor %vm780, %vm781
          %v783 = vsel %vm782, %v775, %v779
          %v784 = vand.u32 2147483647, %v774
          %vm785 = vcmp.eq.f32.partialorder %v784, 8.507059e+37
          %v786 = vand.u32 %v774, 2147483648
          %v787 = vor.u32 1.1754944e-38, %v786
          %v788 = vsel %vm785, %v787, %v783
          %v789 = vmul.f32 1.0, %v788
          %v790 = vadd.f32 %v600, %v754
          %v791 = vxor.u32 %v790, 2147483648
          %v792 = vmul.f32 %v791, 1.442695
          %v793 = vpow.pop %v792
          %v794 = vadd.f32 %v793, 1.0
          %v795 = vrcp.pop %v794
          %v796 = vmul.f32 %v794, %v795
          %v797 = vsub.f32 1.0, %v796
          %v798 = vmul.f32 %v795, %v797
          %v799 = vadd.f32 %v795, %v798
          %vm800 = vweird.f32 %v794
          %vm801 = vweird.f32 %v795
          %vm802 = vmor %vm800, %vm801
          %v803 = vsel %vm802, %v795, %v799
          %v804 = vand.u32 2147483647, %v794
          %vm805 = vcmp.eq.f32.partialorder %v804, 8.507059e+37
          %v806 = vand.u32 %v794, 2147483648
          %v807 = vor.u32 1.1754944e-38, %v806
          %v808 = vsel %vm805, %v807, %v803
          %v809 = vmul.f32 1.0, %v808
          %v810 = vadd.f32 %v767, %v296
          %v811 = vmul.f32 %v789, %v810
          %v812 = vadd.f32 %v601, %v811
          %v813 = vtanh.pop %v812
          %v814 = vsub.f32 1.0, %v809
          %v815 = vmul.f32 %v814, %v813
          %v816 = vmul.f32 %v809, %v595
          %v817 = vadd.f32 %v815, %v816
        $region49: #{tpu_custom_call.1} parent=35 // loop_footer
          %s594 = sadd.s32 1, %s590
        $region50: #{tpu_custom_call.1} parent=35 // loop_footer_branch
          %589 = sbr.rel target = $region46
        $region51: #{tpu_custom_call.1} parent=35 // loop_exit
          _
        %818 = vst [vmem:[%s222] sm:$0xff] %v595
        %s819 = sand.u32 %s117, 1
        %s820 = scalar_lea.sflag [#allocation5], %s819
        %s821 = sand.u32 %s117, 1
        %s822 = smul.addr %s821, 8
        %s823 = scalar_lea.vmem [#allocation8], %s822
        // Predicated region
        $region52: #{tpu_custom_call.1} parent=35 // pred_check
          %p824 = pneg %p127
        $region53: #{tpu_custom_call.1} parent=35 // pred_check_branch
          %826 = sbr.rel (%p824) target = $region55
        $region54: #{tpu_custom_call.1} parent=35 // pred_region
          %828 = vsyncadd %s820, 0
          %s829 = smul.addr %s20, 8
          %s830 = scalar_lea.hbm %s4, %s829
          %s832 = sshll.u32 %s823, 4
          %s833 = int_to_ptr.vmem [resolvable:$true] %s832
          %s834 = sshll.u32 %s830, 4
          %s835 = int_to_ptr.hbm [resolvable:$true] %s834
          %837 = dma.vmem_to_hbm [thread:$0]  %s833, 128, %s835, %s820
        $region55: #{tpu_custom_call.1} parent=35 // pred_fallthru
          _
      $region36: #{tpu_custom_call.1} parent=5 // pred_fallthru
        _
      %p838 = scmp.le.s32.totalorder 2, %s15
      // Predicated region
      $region56: #{tpu_custom_call.1} parent=5 // pred_check
        %p839 = pneg %p838
      $region57: #{tpu_custom_call.1} parent=5 // pred_check_branch
        %841 = sbr.rel (%p839) target = $region59
      $region58: #{tpu_custom_call.1} parent=5 // pred_region
        %s842 = ssub.s32 %s15, 2
        // Predicated region
        $region60: #{tpu_custom_call.1} parent=58 // pred_check
          %p843 = pneg %p133
        $region61: #{tpu_custom_call.1} parent=58 // pred_check_branch
          %845 = sbr.rel (%p843) target = $region63
        $region62: #{tpu_custom_call.1} parent=58 // pred_region
          %s846 = sand.u32 %s118, 1
          %s847 = scalar_lea.sflag [#allocation5], %s846
          %s848 = sand.u32 %s118, 1
          %s849 = smul.addr %s848, 8
          %s850 = scalar_lea.vmem [#allocation8], %s849
          %852 = dma.done %s847, 128
        $region63: #{tpu_custom_call.1} parent=58 // pred_fallthru
          _
      $region59: #{tpu_custom_call.1} parent=5 // pred_fallthru
        _
    $region6: #{tpu_custom_call.1} parent=1 // loop_footer
      %s19 = sadd.s32 1, %s15
    $region7: #{tpu_custom_call.1} parent=1 // loop_footer_branch
      %14 = sbr.rel target = $region3
    $region8: #{tpu_custom_call.1} parent=1 // loop_exit
      _
    %853 = vsyncpa [#allocation4], 1
    %s854 = scalar_lea.sflag [#allocation4], 1
    %855 = vsyncpa %s854, 1
    %856 = vsyncpa [#allocation7], 1
    %857 = vsyncpa [#allocation5], 1
    %s858 = scalar_lea.sflag [#allocation5], 1
    %859 = vsyncpa %s858, 1

</llo_original>
